<compile_context>
chip_gen: v7x
topology: tpu7x:2x2x1
jax: 0.10.0
libtpu: 0.0.40
codegen_flags: <defaults>
</compile_context>

<pallas_src>
import jax
import jax.numpy as jnp
from jax.experimental import pallas as pl
from jax.experimental.pallas import tpu as pltpu

# ---------------- model hyper-parameters (small, TPU-friendly) ----------------
B = 2            # batch
S = 16           # sequence length
E = 128          # embedding dim
F = 128          # filters per conv branch
C = 8            # num classes
V = 64           # vocab size (real)
VPAD = 128       # vocab padded to full MXU K / lane width (rows >= V are zero)
KSIZES = (3, 4, 5)
KMAX = max(KSIZES)
NF = len(KSIZES) * F          # fused filter axis = 3F = 384
CPAD = 128                    # lane-dense padded class dim
KIN = KMAX * VPAD             # im2col contraction dim = 640
OUT_ROWS = 8                  # sublane-dense padded output rows
NEG = -1e30                   # finite large-negative sentinel for invalid positions


def textcnn_kernel(x_ref, wfold_ref, bmask_ref, wfc_ref, bfc_ref, out_ref):
    # ---- MXU round 1: one-hot im2col (embedding folded into weights) x fused conv ----
    acc = jnp.dot(x_ref[...], wfold_ref[...],
                  preferred_element_type=jnp.float32)                 # [B*S, NF] f32
    # bias + (-1e30 on per-branch invalid time positions), then max-over-time + ReLU
    acc = acc.reshape(B, S, NF) + bmask_ref[...]                      # [B, S, NF]
    pooled = jnp.maximum(jnp.max(acc, axis=1), 0.0)                   # [B, NF]
    # pad rows to 8 sublanes -> dense M=8 FC matmul and an unmasked store
    pooled8 = jnp.concatenate(
        [pooled, jnp.zeros((OUT_ROWS - B, NF), jnp.float32)], axis=0) # [8, NF]

    # ---- MXU round 2: lane-dense FC (classes padded to 128 lanes) ----
    logits = jnp.dot(pooled8.astype(jnp.bfloat16), wfc_ref[...],
                     preferred_element_type=jnp.float32) + bfc_ref[...]   # [8, CPAD]
    out_ref[...] = logits


@jax.jit
def textcnn_forward(token_ids, params):
    """token_ids: [B, S] int32. Returns logits [B, C] float32."""
    # One-hot im2col built by XLA (tiny: 32x640 bf16 = 40 KB extra DMA).  Row (b, t),
    # column block j holds one_hot(ids[b, t+j]).  Out-of-range positions use sentinel
    # id V, whose folded-weight rows are exactly zero; those time positions are also
    # masked (via bmask) before the pool.
    ids_pad = jnp.pad(token_ids, ((0, 0), (0, KMAX - 1)), constant_values=V)  # [B, S+KMAX-1]
    shifted = jnp.stack([ids_pad[:, j:j + S] for j in range(KMAX)], axis=2)   # [B, S, KMAX]
    x_im2col = jax.nn.one_hot(shifted, VPAD, dtype=jnp.bfloat16).reshape(B * S, KIN)

    flops = 2 * (B * S * KIN * NF + OUT_ROWS * NF * CPAD)
    bytes_accessed = (x_im2col.size * 2
                      + params["wfold"].size * 2 + params["wfc"].size * 2
                      + params["bmask"].size * 4 + params["bfc"].size * 4
                      + OUT_ROWS * CPAD * 4)

    vmem = pl.BlockSpec(memory_space=pltpu.MemorySpace.VMEM)
    logits_pad = pl.pallas_call(
        textcnn_kernel,
        out_shape=jax.ShapeDtypeStruct((OUT_ROWS, CPAD), jnp.float32),
        in_specs=[vmem] * 5,
        out_specs=vmem,
        cost_estimate=pl.CostEstimate(
            flops=flops, transcendentals=0, bytes_accessed=bytes_accessed),
    )(x_im2col, params["wfold"], params["bmask"], params["wfc"], params["bfc"])
    return logits_pad[:B, :C]


def init_params(key):
    keys = jax.random.split(key, 9)
    scale = 0.02
    emb = scale * jax.random.normal(keys[0], (V, E), jnp.float32)
    w3 = scale * jax.random.normal(keys[1], (KSIZES[0], E, F), jnp.float32)
    w4 = scale * jax.random.normal(keys[2], (KSIZES[1], E, F), jnp.float32)
    w5 = scale * jax.random.normal(keys[3], (KSIZES[2], E, F), jnp.float32)
    b3 = scale * jax.random.normal(keys[4], (F,), jnp.float32)
    b4 = scale * jax.random.normal(keys[5], (F,), jnp.float32)
    b5 = scale * jax.random.normal(keys[6], (F,), jnp.float32)
    wfc = scale * jax.random.normal(keys[7], (NF, C), jnp.float32)
    bfc = scale * jax.random.normal(keys[8], (C,), jnp.float32)
    masters = dict(emb=emb, w3=w3, w4=w4, w5=w5, b3=b3, b4=b4, b5=b5, wfc=wfc, bfc=bfc)

    # ---- pack kernel params ----
    # Vocab padded to VPAD rows (zeros; ids < V, sentinel row V stays exactly zero).
    emb_pad = jnp.zeros((VPAD, E), jnp.float32).at[:V].set(emb)

    # Fuse the 3 branches along the filter axis; zero taps pad k=3/k=4 up to KMAX.
    wconv = jnp.zeros((KMAX, E, NF), jnp.float32)
    wconv = wconv.at[:KSIZES[0], :, 0 * F:1 * F].set(w3)
    wconv = wconv.at[:KSIZES[1], :, 1 * F:2 * F].set(w4)
    wconv = wconv.at[:KSIZES[2], :, 2 * F:3 * F].set(w5)

    # Fold the embedding into the conv weights (f32 fold, single bf16 cast at the end):
    #   wfold[j*VPAD + v, :] == emb_pad[v] @ wconv[j]
    wfold = jnp.einsum("ve,kef->kvf", emb_pad, wconv,
                       precision="highest").reshape(KIN, NF)

    # Bias + per-branch validity mask merged into one [S, NF] f32 additive tensor.
    bconv = jnp.concatenate([b3, b4, b5])                                       # [NF]
    limits = jnp.repeat(jnp.array([S - k + 1 for k in KSIZES], jnp.int32), F)   # [NF]
    valid = jnp.arange(S, dtype=jnp.int32)[:, None] < limits[None, :]           # [S, NF]
    bmask = jnp.where(valid, bconv[None, :], NEG).astype(jnp.float32)

    # Pad FC to 128 output lanes (lane-dense store); real classes are [:, :C].
    wfc_pad = jnp.zeros((NF, CPAD), jnp.float32).at[:, :C].set(wfc)
    bfc_pad = jnp.zeros((1, CPAD), jnp.float32).at[0, :C].set(bfc)

    kparams = {
        "wfold": wfold.astype(jnp.bfloat16),   # bf16 MXU operand, [640, 384]
        "bmask": bmask,                        # f32 [S, NF]
        "wfc": wfc_pad.astype(jnp.bfloat16),   # bf16 MXU operand, [384, 128]
        "bfc": bfc_pad,                        # f32 [1, 128]
    }
    return masters, kparams


def reference_forward(token_ids, masters):
    """Pure-JAX f32 reference: canonical TextCNN forward."""
    x = masters["emb"][token_ids]                                               # [B, S, E]
    feats = []
    for k, wk, bk in ((KSIZES[0], masters["w3"], masters["b3"]),
                      (KSIZES[1], masters["w4"], masters["b4"]),
                      (KSIZES[2], masters["w5"], masters["b5"])):
        L = S - k + 1
        acc = jnp.zeros((B, L, F), jnp.float32)
        for j in range(k):
            acc = acc + jnp.einsum("ble,ef->blf", x[:, j:j + L, :], wk[j],
                                   precision="highest")
        h = jnp.maximum(acc + bk, 0.0)                                          # ReLU(conv + b)
        feats.append(jnp.max(h, axis=1))                                        # max-over-time
    feat = jnp.concatenate(feats, axis=-1)                                      # [B, NF]
    return jnp.dot(feat, masters["wfc"], precision="highest") + masters["bfc"]  # [B, C]


if __name__ == "__main__":
    key = jax.random.PRNGKey(0)
    pkey, dkey = jax.random.split(key)
    masters, kparams = init_params(pkey)

    # deterministic token ids [B, S]
    token_ids = jax.random.randint(dkey, (B, S), 0, V, dtype=jnp.int32)

    logits = jax.block_until_ready(textcnn_forward(token_ids, kparams))
    assert logits.shape == (B, C)
    assert bool(jnp.all(jnp.isfinite(logits)))

    ref = jax.block_until_ready(reference_forward(token_ids, masters))
    max_err = float(jnp.max(jnp.abs(logits - ref)))
    assert jnp.allclose(logits, ref, rtol=2e-2, atol=3e-3), f"max abs err {max_err}"

    print("KERNEL_OK")
</pallas_src>

<mosaic_0001>
module attributes {stable_mosaic.version = 11 : i64} {
  func.func @textcnn_kernel(%arg0: memref<32x640xbf16, #tpu.memory_space<vmem>>, %arg1: memref<640x384xbf16, #tpu.memory_space<vmem>>, %arg2: memref<16x384xf32, #tpu.memory_space<vmem>>, %arg3: memref<384x128xbf16, #tpu.memory_space<vmem>>, %arg4: memref<1x128xf32, #tpu.memory_space<vmem>>, %arg5: memref<8x128xf32, #tpu.memory_space<vmem>>) attributes {dimension_semantics = [], scalar_prefetch = 0 : i64, scratch_operands = 0 : i64, tpu.core_type = #tpu.core_type<tc>} {
    %c0 = arith.constant 0 : index
    %c0_0 = arith.constant 0 : index
    %0 = vector.load %arg0[%c0, %c0_0] : memref<32x640xbf16, #tpu.memory_space<vmem>>, vector<32x640xbf16>
    %c0_1 = arith.constant 0 : index
    %c0_2 = arith.constant 0 : index
    %1 = vector.load %arg1[%c0_1, %c0_2] : memref<640x384xbf16, #tpu.memory_space<vmem>>, vector<640x384xbf16>
    %cst = arith.constant dense<0.000000e+00> : vector<32x384xf32>
    %2 = tpu.matmul %0, %1, %cst {dimension_numbers = #tpu.dot_dimension_numbers<[1], [0], [0], [1], [0, 0, 1, 1], [], []>} : vector<32x640xbf16>, vector<640x384xbf16>, vector<32x384xf32> -> vector<32x384xf32>
    %3 = vector.shape_cast %2 : vector<32x384xf32> to vector<2x16x384xf32>
    %c0_3 = arith.constant 0 : index
    %c0_4 = arith.constant 0 : index
    %4 = vector.load %arg2[%c0_3, %c0_4] : memref<16x384xf32, #tpu.memory_space<vmem>>, vector<16x384xf32>
    %5 = vector.shape_cast %4 : vector<16x384xf32> to vector<1x16x384xf32>
    %6 = vector.broadcast %5 : vector<1x16x384xf32> to vector<2x16x384xf32>
    %7 = arith.addf %3, %6 : vector<2x16x384xf32>
    %cst_5 = arith.constant dense<0xFF800000> : vector<2x384xf32>
    %8 = vector.multi_reduction <maximumf>, %7, %cst_5 [1] : vector<2x16x384xf32> to vector<2x384xf32>
    %cst_6 = arith.constant 0.000000e+00 : f32
    %9 = vector.broadcast %cst_6 : f32 to vector<2x384xf32>
    %10 = arith.maximumf %8, %9 : vector<2x384xf32>
    %cst_7 = arith.constant 0.000000e+00 : f32
    %11 = vector.broadcast %cst_7 : f32 to vector<6x384xf32>
    %12 = tpu.concatenate %10, %11 in 0 : vector<2x384xf32>, vector<6x384xf32> -> vector<8x384xf32>
    %13 = arith.truncf %12 : vector<8x384xf32> to vector<8x384xbf16>
    %c0_8 = arith.constant 0 : index
    %c0_9 = arith.constant 0 : index
    %14 = vector.load %arg3[%c0_8, %c0_9] : memref<384x128xbf16, #tpu.memory_space<vmem>>, vector<384x128xbf16>
    %cst_10 = arith.constant dense<0.000000e+00> : vector<8x128xf32>
    %15 = tpu.matmul %13, %14, %cst_10 {dimension_numbers = #tpu.dot_dimension_numbers<[1], [0], [0], [1], [0, 0, 1, 1], [], []>} : vector<8x384xbf16>, vector<384x128xbf16>, vector<8x128xf32> -> vector<8x128xf32>
    %c0_11 = arith.constant 0 : index
    %c0_12 = arith.constant 0 : index
    %16 = vector.load %arg4[%c0_11, %c0_12] : memref<1x128xf32, #tpu.memory_space<vmem>>, vector<1x128xf32>
    %17 = vector.broadcast %16 : vector<1x128xf32> to vector<8x128xf32>
    %18 = arith.addf %15, %17 : vector<8x128xf32>
    %c0_13 = arith.constant 0 : index
    %c0_14 = arith.constant 0 : index
    %19 = vector.load %arg5[%c0_13, %c0_14] : memref<8x128xf32, #tpu.memory_space<vmem>>, vector<8x128xf32>
    tpu.vector_store %arg5[%c0_13, %c0_14], %18 {strides = array<i32>} : memref<8x128xf32, #tpu.memory_space<vmem>>, vector<8x128xf32>,
    return
  }
}

</mosaic_0001>

<llo_original>
// kernel: textcnn_forward.1
$region0: #{textcnn_forward.1}
  #allocation0 [shape = 'u32[]', space=smem, size = 0x4, offset = 0x4, fixed_abs, tag = 'smem constant byte address 0x4 - core index']
  #allocation1 [shape = 'u32[144,128]{1,0:T(1,128)}', space=vmem, size = 0x12000, scoped, tag = 'internal scratch']
  %s0 = inlined_call_operand.vmem [shape: bf16[32,640], index: 0, kind: input, shape index: {}]
  %s1 = inlined_call_operand.hbm [shape: bf16[640,384], index: 1, kind: input, shape index: {}]
  %s2 = inlined_call_operand.vmem [shape: f32[16,384], index: 2, kind: input, shape index: {}]
  %s3 = inlined_call_operand.vmem [shape: bf16[384,128], index: 3, kind: input, shape index: {}]
  %s4 = inlined_call_operand.vmem [shape: f32[1,128], index: 4, kind: input, shape index: {}]
  %s5 = inlined_call_operand.vmem [shape: f32[8,128], index: 5, kind: output, shape index: {}]
  %s6 = sld [smem:[#allocation0]]
  $region34: #{textcnn_forward.1} parent=0
    _
  %s8 = ssub.s32 1, %s6
  %s9 = scalar_select 0, %s8, %s6
  $region1: #{textcnn_forward.1} parent=0
    #allocation2 [shape = 'u8[491520]{0}', space=vmem, size = 0x78000, scoped, tag = 'input window, operand 1, single buffered']
    #allocation3 [shape = 's32[1]{0}', space=sflag, size = 0x4, scoped, tag = 'scoped memory for textcnn_forward.1']
    %10 = vsyncpa [#allocation3], 0
    // Predicated region
    $region2: #{textcnn_forward.1} parent=1 // pred_check
      _
    $region3: #{textcnn_forward.1} parent=1 // pred_check_branch
      %12 = sbr.rel (0) target = $region5
    $region4: #{textcnn_forward.1} parent=1 // pred_region
      _
    $region5: #{textcnn_forward.1} parent=1 // pred_fallthru
      _
    // Predicated region
    $region6: #{textcnn_forward.1} parent=1 // pred_check
      _
    $region7: #{textcnn_forward.1} parent=1 // pred_check_branch
      %14 = sbr.rel (0) target = $region9
    $region8: #{textcnn_forward.1} parent=1 // pred_region
      %s16 = ssub.s32 15360, 15360
      %17 = vsyncadd [#allocation3], %s16
      %s18 = sshll.u32 [#allocation2], 4
      %s19 = int_to_ptr.vmem [resolvable:$true] %s18
      %24 = dma.hbm_to_vmem [thread:$0]  %s1, 15360, %s19, [#allocation3], 192, 192, 12
    $region9: #{textcnn_forward.1} parent=1 // pred_fallthru
      _
    // Predicated region
    $region10: #{textcnn_forward.1} parent=1 // pred_check
      _
    $region11: #{textcnn_forward.1} parent=1 // pred_check_branch
      %26 = sbr.rel (0) target = $region13
    $region12: #{textcnn_forward.1} parent=1 // pred_region
      _
    $region13: #{textcnn_forward.1} parent=1 // pred_fallthru
      _
    // Predicated region
    $region14: #{textcnn_forward.1} parent=1 // pred_check
      _
    $region15: #{textcnn_forward.1} parent=1 // pred_check_branch
      %28 = sbr.rel (0) target = $region17
    $region16: #{textcnn_forward.1} parent=1 // pred_region
      _
    $region17: #{textcnn_forward.1} parent=1 // pred_fallthru
      _
    // Predicated region
    $region18: #{textcnn_forward.1} parent=1 // pred_check
      _
    $region19: #{textcnn_forward.1} parent=1 // pred_check_branch
      %30 = sbr.rel (0) target = $region21
    $region20: #{textcnn_forward.1} parent=1 // pred_region
      _
    $region21: #{textcnn_forward.1} parent=1 // pred_fallthru
      _
    // Predicated region
    $region22: #{textcnn_forward.1} parent=1 // pred_check
      _
    $region23: #{textcnn_forward.1} parent=1 // pred_check_branch
      %32 = sbr.rel (0) target = $region25
    $region24: #{textcnn_forward.1} parent=1 // pred_region
      %33 = dma.done [#allocation3], 15360
    $region25: #{textcnn_forward.1} parent=1 // pred_fallthru
      _
    %v35 = vld [vmem:[%s0] sm:$0xff]
    %v36 = vld [vmem:[%s0 + $0x8] sm:$0xff]
    %v37 = vld [vmem:[%s0 + $0x10] sm:$0xf]
    %v38 = vld [vmem:[%s0 + $0x14] sm:$0xff]
    %v39 = vld [vmem:[%s0 + $0x1c] sm:$0xff]
    %v40 = vld [vmem:[%s0 + $0x24] sm:$0xf]
    %v41 = vld [vmem:[%s0 + $0x28] sm:$0xff]
    %v42 = vld [vmem:[%s0 + $0x30] sm:$0xff]
    %v43 = vld [vmem:[%s0 + $0x38] sm:$0xf]
    %v44 = vld [vmem:[%s0 + $0x3c] sm:$0xff]
    %v45 = vld [vmem:[%s0 + $0x44] sm:$0xff]
    %v46 = vld [vmem:[%s0 + $0x4c] sm:$0xf]
    %v47 = vld [vmem:[#allocation2] sm:$0xff]
    %v48 = vld [vmem:[#allocation2 + $0x8] sm:$0xf]
    %v49 = vld [vmem:[#allocation2 + $0xc] sm:$0xff]
    %v50 = vld [vmem:[#allocation2 + $0x14] sm:$0xf]
    %v51 = vld [vmem:[#allocation2 + $0x18] sm:$0xff]
    %v52 = vld [vmem:[#allocation2 + $0x20] sm:$0xf]
    %v53 = vld [vmem:[#allocation2 + $0x24] sm:$0xff]
    %v54 = vld [vmem:[#allocation2 + $0x2c] sm:$0xf]
    %v55 = vld [vmem:[#allocation2 + $0x30] sm:$0xff]
    %v56 = vld [vmem:[#allocation2 + $0x38] sm:$0xf]
    %v57 = vld [vmem:[#allocation2 + $0x3c] sm:$0xff]
    %v58 = vld [vmem:[#allocation2 + $0x44] sm:$0xf]
    %v59 = vld [vmem:[#allocation2 + $0x48] sm:$0xff]
    %v60 = vld [vmem:[#allocation2 + $0x50] sm:$0xf]
    %v61 = vld [vmem:[#allocation2 + $0x54] sm:$0xff]
    %v62 = vld [vmem:[#allocation2 + $0x5c] sm:$0xf]
    %v63 = vld [vmem:[#allocation2 + $0x60] sm:$0xff]
    %v64 = vld [vmem:[#allocation2 + $0x68] sm:$0xf]
    %v65 = vld [vmem:[#allocation2 + $0x6c] sm:$0xff]
    %v66 = vld [vmem:[#allocation2 + $0x74] sm:$0xf]
    %v67 = vld [vmem:[#allocation2 + $0x78] sm:$0xff]
    %v68 = vld [vmem:[#allocation2 + $0x80] sm:$0xf]
    %v69 = vld [vmem:[#allocation2 + $0x84] sm:$0xff]
    %v70 = vld [vmem:[#allocation2 + $0x8c] sm:$0xf]
    %v71 = vld [vmem:[#allocation2 + $0x90] sm:$0xff]
    %v72 = vld [vmem:[#allocation2 + $0x98] sm:$0xf]
    %v73 = vld [vmem:[#allocation2 + $0x9c] sm:$0xff]
    %v74 = vld [vmem:[#allocation2 + $0xa4] sm:$0xf]
    %v75 = vld [vmem:[#allocation2 + $0xa8] sm:$0xff]
    %v76 = vld [vmem:[#allocation2 + $0xb0] sm:$0xf]
    %v77 = vld [vmem:[#allocation2 + $0xb4] sm:$0xff]
    %v78 = vld [vmem:[#allocation2 + $0xbc] sm:$0xf]
    %v79 = vld [vmem:[#allocation2 + $0xc0] sm:$0xff]
    %v80 = vld [vmem:[#allocation2 + $0xc8] sm:$0xf]
    %v81 = vld [vmem:[#allocation2 + $0xcc] sm:$0xff]
    %v82 = vld [vmem:[#allocation2 + $0xd4] sm:$0xf]
    %v83 = vld [vmem:[#allocation2 + $0xd8] sm:$0xff]
    %v84 = vld [vmem:[#allocation2 + $0xe0] sm:$0xf]
    %v85 = vld [vmem:[#allocation2 + $0xe4] sm:$0xff]
    %v86 = vld [vmem:[#allocation2 + $0xec] sm:$0xf]
    %v87 = vld [vmem:[#allocation2 + $0xf0] sm:$0xff]
    %v88 = vld [vmem:[#allocation2 + $0xf8] sm:$0xf]
    %v89 = vld [vmem:[#allocation2 + $0xfc] sm:$0xff]
    %v90 = vld [vmem:[#allocation2 + $0x104] sm:$0xf]
    %v91 = vld [vmem:[#allocation2 + $0x108] sm:$0xff]
    %v92 = vld [vmem:[#allocation2 + $0x110] sm:$0xf]
    %v93 = vld [vmem:[#allocation2 + $0x114] sm:$0xff]
    %v94 = vld [vmem:[#allocation2 + $0x11c] sm:$0xf]
    %v95 = vld [vmem:[#allocation2 + $0x120] sm:$0xff]
    %v96 = vld [vmem:[#allocation2 + $0x128] sm:$0xf]
    %v97 = vld [vmem:[#allocation2 + $0x12c] sm:$0xff]
    %v98 = vld [vmem:[#allocation2 + $0x134] sm:$0xf]
    %v99 = vld [vmem:[#allocation2 + $0x138] sm:$0xff]
    %v100 = vld [vmem:[#allocation2 + $0x140] sm:$0xf]
    %v101 = vld [vmem:[#allocation2 + $0x144] sm:$0xff]
    %v102 = vld [vmem:[#allocation2 + $0x14c] sm:$0xf]
    %v103 = vld [vmem:[#allocation2 + $0x150] sm:$0xff]
    %v104 = vld [vmem:[#allocation2 + $0x158] sm:$0xf]
    %v105 = vld [vmem:[#allocation2 + $0x15c] sm:$0xff]
    %v106 = vld [vmem:[#allocation2 + $0x164] sm:$0xf]
    %v107 = vld [vmem:[#allocation2 + $0x168] sm:$0xff]
    %v108 = vld [vmem:[#allocation2 + $0x170] sm:$0xf]
    %v109 = vld [vmem:[#allocation2 + $0x174] sm:$0xff]
    %v110 = vld [vmem:[#allocation2 + $0x17c] sm:$0xf]
    %v111 = vld [vmem:[#allocation2 + $0x180] sm:$0xff]
    %v112 = vld [vmem:[#allocation2 + $0x188] sm:$0xf]
    %v113 = vld [vmem:[#allocation2 + $0x18c] sm:$0xff]
    %v114 = vld [vmem:[#allocation2 + $0x194] sm:$0xf]
    %v115 = vld [vmem:[#allocation2 + $0x198] sm:$0xff]
    %v116 = vld [vmem:[#allocation2 + $0x1a0] sm:$0xf]
    %v117 = vld [vmem:[#allocation2 + $0x1a4] sm:$0xff]
    %v118 = vld [vmem:[#allocation2 + $0x1ac] sm:$0xf]
    %v119 = vld [vmem:[#allocation2 + $0x1b0] sm:$0xff]
    %v120 = vld [vmem:[#allocation2 + $0x1b8] sm:$0xf]
    %v121 = vld [vmem:[#allocation2 + $0x1bc] sm:$0xff]
    %v122 = vld [vmem:[#allocation2 + $0x1c4] sm:$0xf]
    %v123 = vld [vmem:[#allocation2 + $0x1c8] sm:$0xff]
    %v124 = vld [vmem:[#allocation2 + $0x1d0] sm:$0xf]
    %v125 = vld [vmem:[#allocation2 + $0x1d4] sm:$0xff]
    %v126 = vld [vmem:[#allocation2 + $0x1dc] sm:$0xf]
    %v127 = vld [vmem:[#allocation2 + $0x1e0] sm:$0xff]
    %v128 = vld [vmem:[#allocation2 + $0x1e8] sm:$0xf]
    %v129 = vld [vmem:[#allocation2 + $0x1ec] sm:$0xff]
    %v130 = vld [vmem:[#allocation2 + $0x1f4] sm:$0xf]
    %v131 = vld [vmem:[#allocation2 + $0x1f8] sm:$0xff]
    %v132 = vld [vmem:[#allocation2 + $0x200] sm:$0xf]
    %v133 = vld [vmem:[#allocation2 + $0x204] sm:$0xff]
    %v134 = vld [vmem:[#allocation2 + $0x20c] sm:$0xf]
    %v135 = vld [vmem:[#allocation2 + $0x210] sm:$0xff]
    %v136 = vld [vmem:[#allocation2 + $0x218] sm:$0xf]
    %v137 = vld [vmem:[#allocation2 + $0x21c] sm:$0xff]
    %v138 = vld [vmem:[#allocation2 + $0x224] sm:$0xf]
    %v139 = vld [vmem:[#allocation2 + $0x228] sm:$0xff]
    %v140 = vld [vmem:[#allocation2 + $0x230] sm:$0xf]
    %v141 = vld [vmem:[#allocation2 + $0x234] sm:$0xff]
    %v142 = vld [vmem:[#allocation2 + $0x23c] sm:$0xf]
    %v143 = vld [vmem:[#allocation2 + $0x240] sm:$0xff]
    %v144 = vld [vmem:[#allocation2 + $0x248] sm:$0xf]
    %v145 = vld [vmem:[#allocation2 + $0x24c] sm:$0xff]
    %v146 = vld [vmem:[#allocation2 + $0x254] sm:$0xf]
    %v147 = vld [vmem:[#allocation2 + $0x258] sm:$0xff]
    %v148 = vld [vmem:[#allocation2 + $0x260] sm:$0xf]
    %v149 = vld [vmem:[#allocation2 + $0x264] sm:$0xff]
    %v150 = vld [vmem:[#allocation2 + $0x26c] sm:$0xf]
    %v151 = vld [vmem:[#allocation2 + $0x270] sm:$0xff]
    %v152 = vld [vmem:[#allocation2 + $0x278] sm:$0xf]
    %v153 = vld [vmem:[#allocation2 + $0x27c] sm:$0xff]
    %v154 = vld [vmem:[#allocation2 + $0x284] sm:$0xf]
    %v155 = vld [vmem:[#allocation2 + $0x288] sm:$0xff]
    %v156 = vld [vmem:[#allocation2 + $0x290] sm:$0xf]
    %v157 = vld [vmem:[#allocation2 + $0x294] sm:$0xff]
    %v158 = vld [vmem:[#allocation2 + $0x29c] sm:$0xf]
    %v159 = vld [vmem:[#allocation2 + $0x2a0] sm:$0xff]
    %v160 = vld [vmem:[#allocation2 + $0x2a8] sm:$0xf]
    %v161 = vld [vmem:[#allocation2 + $0x2ac] sm:$0xff]
    %v162 = vld [vmem:[#allocation2 + $0x2b4] sm:$0xf]
    %v163 = vld [vmem:[#allocation2 + $0x2b8] sm:$0xff]
    %v164 = vld [vmem:[#allocation2 + $0x2c0] sm:$0xf]
    %v165 = vld [vmem:[#allocation2 + $0x2c4] sm:$0xff]
    %v166 = vld [vmem:[#allocation2 + $0x2cc] sm:$0xf]
    %v167 = vld [vmem:[#allocation2 + $0x2d0] sm:$0xff]
    %v168 = vld [vmem:[#allocation2 + $0x2d8] sm:$0xf]
    %v169 = vld [vmem:[#allocation2 + $0x2dc] sm:$0xff]
    %v170 = vld [vmem:[#allocation2 + $0x2e4] sm:$0xf]
    %v171 = vld [vmem:[#allocation2 + $0x2e8] sm:$0xff]
    %v172 = vld [vmem:[#allocation2 + $0x2f0] sm:$0xf]
    %v173 = vld [vmem:[#allocation2 + $0x2f4] sm:$0xff]
    %v174 = vld [vmem:[#allocation2 + $0x2fc] sm:$0xf]
    %v175 = vld [vmem:[#allocation2 + $0x300] sm:$0xff]
    %v176 = vld [vmem:[#allocation2 + $0x308] sm:$0xf]
    %v177 = vld [vmem:[#allocation2 + $0x30c] sm:$0xff]
    %v178 = vld [vmem:[#allocation2 + $0x314] sm:$0xf]
    %v179 = vld [vmem:[#allocation2 + $0x318] sm:$0xff]
    %v180 = vld [vmem:[#allocation2 + $0x320] sm:$0xf]
    %v181 = vld [vmem:[#allocation2 + $0x324] sm:$0xff]
    %v182 = vld [vmem:[#allocation2 + $0x32c] sm:$0xf]
    %v183 = vld [vmem:[#allocation2 + $0x330] sm:$0xff]
    %v184 = vld [vmem:[#allocation2 + $0x338] sm:$0xf]
    %v185 = vld [vmem:[#allocation2 + $0x33c] sm:$0xff]
    %v186 = vld [vmem:[#allocation2 + $0x344] sm:$0xf]
    %v187 = vld [vmem:[#allocation2 + $0x348] sm:$0xff]
    %v188 = vld [vmem:[#allocation2 + $0x350] sm:$0xf]
    %v189 = vld [vmem:[#allocation2 + $0x354] sm:$0xff]
    %v190 = vld [vmem:[#allocation2 + $0x35c] sm:$0xf]
    %v191 = vld [vmem:[#allocation2 + $0x360] sm:$0xff]
    %v192 = vld [vmem:[#allocation2 + $0x368] sm:$0xf]
    %v193 = vld [vmem:[#allocation2 + $0x36c] sm:$0xff]
    %v194 = vld [vmem:[#allocation2 + $0x374] sm:$0xf]
    %v195 = vld [vmem:[#allocation2 + $0x378] sm:$0xff]
    %v196 = vld [vmem:[#allocation2 + $0x380] sm:$0xf]
    %v197 = vld [vmem:[#allocation2 + $0x384] sm:$0xff]
    %v198 = vld [vmem:[#allocation2 + $0x38c] sm:$0xf]
    %v199 = vld [vmem:[#allocation2 + $0x390] sm:$0xff]
    %v200 = vld [vmem:[#allocation2 + $0x398] sm:$0xf]
    %v201 = vld [vmem:[#allocation2 + $0x39c] sm:$0xff]
    %v202 = vld [vmem:[#allocation2 + $0x3a4] sm:$0xf]
    %v203 = vld [vmem:[#allocation2 + $0x3a8] sm:$0xff]
    %v204 = vld [vmem:[#allocation2 + $0x3b0] sm:$0xf]
    %v205 = vld [vmem:[#allocation2 + $0x3b4] sm:$0xff]
    %v206 = vld [vmem:[#allocation2 + $0x3bc] sm:$0xf]
    %v219 = vunpack.c.l.b16 %v35
    %v220 = vunpack.c.h.b16 %v35
    %v221 = vunpack.c.l.b16 %v36
    %v222 = vunpack.c.h.b16 %v36
    %v223 = vunpack.c.l.b16 %v37
    %v224 = vunpack.c.l.b16 %v38
    %v225 = vunpack.c.h.b16 %v38
    %v226 = vunpack.c.l.b16 %v39
    %v227 = vunpack.c.h.b16 %v39
    %v228 = vunpack.c.l.b16 %v40
    %v229 = vunpack.c.l.b16 %v41
    %v230 = vunpack.c.h.b16 %v41
    %v231 = vunpack.c.l.b16 %v42
    %v232 = vunpack.c.h.b16 %v42
    %v233 = vunpack.c.l.b16 %v43
    %v234 = vunpack.c.l.b16 %v44
    %v235 = vunpack.c.h.b16 %v44
    %v236 = vunpack.c.l.b16 %v45
    %v237 = vunpack.c.h.b16 %v45
    %v238 = vunpack.c.l.b16 %v46
    %v239 = vpack.c.b16 %v224, %v219
    %v240 = vpack.c.b16 %v225, %v220
    %v241 = vpack.c.b16 %v226, %v221
    %v242 = vpack.c.b16 %v227, %v222
    %v243 = vpack.c.b16 %v228, %v223
    %v244 = vpack.c.b16 %v234, %v229
    %v245 = vpack.c.b16 %v235, %v230
    %v246 = vpack.c.b16 %v236, %v231
    %v247 = vpack.c.b16 %v237, %v232
    %v248 = vpack.c.b16 %v238, %v233
    %v419 = vunpack.c.l.b16 %v47
    %v420 = vunpack.c.h.b16 %v47
    %v421 = vunpack.c.l.b16 %v48
    %v422 = vunpack.c.l.b16 %v49
    %v423 = vunpack.c.h.b16 %v49
    %v424 = vunpack.c.l.b16 %v50
    %v425 = vunpack.c.l.b16 %v51
    %v426 = vunpack.c.h.b16 %v51
    %v427 = vunpack.c.l.b16 %v52
    %v428 = vunpack.c.l.b16 %v53
    %v429 = vunpack.c.h.b16 %v53
    %v430 = vunpack.c.l.b16 %v54
    %v431 = vunpack.c.l.b16 %v55
    %v432 = vunpack.c.h.b16 %v55
    %v433 = vunpack.c.l.b16 %v56
    %v434 = vunpack.c.l.b16 %v57
    %v435 = vunpack.c.h.b16 %v57
    %v436 = vunpack.c.l.b16 %v58
    %v437 = vunpack.c.l.b16 %v59
    %v438 = vunpack.c.h.b16 %v59
    %v439 = vunpack.c.l.b16 %v60
    %v440 = vunpack.c.l.b16 %v61
    %v441 = vunpack.c.h.b16 %v61
    %v442 = vunpack.c.l.b16 %v62
    %v443 = vunpack.c.l.b16 %v63
    %v444 = vunpack.c.h.b16 %v63
    %v445 = vunpack.c.l.b16 %v64
    %v446 = vunpack.c.l.b16 %v65
    %v447 = vunpack.c.h.b16 %v65
    %v448 = vunpack.c.l.b16 %v66
    %v449 = vunpack.c.l.b16 %v67
    %v450 = vunpack.c.h.b16 %v67
    %v451 = vunpack.c.l.b16 %v68
    %v452 = vunpack.c.l.b16 %v69
    %v453 = vunpack.c.h.b16 %v69
    %v454 = vunpack.c.l.b16 %v70
    %v455 = vunpack.c.l.b16 %v71
    %v456 = vunpack.c.h.b16 %v71
    %v457 = vunpack.c.l.b16 %v72
    %v458 = vunpack.c.l.b16 %v73
    %v459 = vunpack.c.h.b16 %v73
    %v460 = vunpack.c.l.b16 %v74
    %v461 = vunpack.c.l.b16 %v75
    %v462 = vunpack.c.h.b16 %v75
    %v463 = vunpack.c.l.b16 %v76
    %v464 = vunpack.c.l.b16 %v77
    %v465 = vunpack.c.h.b16 %v77
    %v466 = vunpack.c.l.b16 %v78
    %v467 = vunpack.c.l.b16 %v79
    %v468 = vunpack.c.h.b16 %v79
    %v469 = vunpack.c.l.b16 %v80
    %v470 = vunpack.c.l.b16 %v81
    %v471 = vunpack.c.h.b16 %v81
    %v472 = vunpack.c.l.b16 %v82
    %v473 = vunpack.c.l.b16 %v83
    %v474 = vunpack.c.h.b16 %v83
    %v475 = vunpack.c.l.b16 %v84
    %v476 = vunpack.c.l.b16 %v85
    %v477 = vunpack.c.h.b16 %v85
    %v478 = vunpack.c.l.b16 %v86
    %v479 = vunpack.c.l.b16 %v87
    %v480 = vunpack.c.h.b16 %v87
    %v481 = vunpack.c.l.b16 %v88
    %v482 = vunpack.c.l.b16 %v89
    %v483 = vunpack.c.h.b16 %v89
    %v484 = vunpack.c.l.b16 %v90
    %v485 = vunpack.c.l.b16 %v91
    %v486 = vunpack.c.h.b16 %v91
    %v487 = vunpack.c.l.b16 %v92
    %v488 = vunpack.c.l.b16 %v93
    %v489 = vunpack.c.h.b16 %v93
    %v490 = vunpack.c.l.b16 %v94
    %v491 = vunpack.c.l.b16 %v95
    %v492 = vunpack.c.h.b16 %v95
    %v493 = vunpack.c.l.b16 %v96
    %v494 = vunpack.c.l.b16 %v97
    %v495 = vunpack.c.h.b16 %v97
    %v496 = vunpack.c.l.b16 %v98
    %v497 = vunpack.c.l.b16 %v99
    %v498 = vunpack.c.h.b16 %v99
    %v499 = vunpack.c.l.b16 %v100
    %v500 = vunpack.c.l.b16 %v101
    %v501 = vunpack.c.h.b16 %v101
    %v502 = vunpack.c.l.b16 %v102
    %v503 = vunpack.c.l.b16 %v103
    %v504 = vunpack.c.h.b16 %v103
    %v505 = vunpack.c.l.b16 %v104
    %v506 = vunpack.c.l.b16 %v105
    %v507 = vunpack.c.h.b16 %v105
    %v508 = vunpack.c.l.b16 %v106
    %v509 = vunpack.c.l.b16 %v107
    %v510 = vunpack.c.h.b16 %v107
    %v511 = vunpack.c.l.b16 %v108
    %v512 = vunpack.c.l.b16 %v109
    %v513 = vunpack.c.h.b16 %v109
    %v514 = vunpack.c.l.b16 %v110
    %v515 = vunpack.c.l.b16 %v111
    %v516 = vunpack.c.h.b16 %v111
    %v517 = vunpack.c.l.b16 %v112
    %v518 = vunpack.c.l.b16 %v113
    %v519 = vunpack.c.h.b16 %v113
    %v520 = vunpack.c.l.b16 %v114
    %v521 = vunpack.c.l.b16 %v115
    %v522 = vunpack.c.h.b16 %v115
    %v523 = vunpack.c.l.b16 %v116
    %v524 = vunpack.c.l.b16 %v117
    %v525 = vunpack.c.h.b16 %v117
    %v526 = vunpack.c.l.b16 %v118
    %v527 = vunpack.c.l.b16 %v119
    %v528 = vunpack.c.h.b16 %v119
    %v529 = vunpack.c.l.b16 %v120
    %v530 = vunpack.c.l.b16 %v121
    %v531 = vunpack.c.h.b16 %v121
    %v532 = vunpack.c.l.b16 %v122
    %v533 = vunpack.c.l.b16 %v123
    %v534 = vunpack.c.h.b16 %v123
    %v535 = vunpack.c.l.b16 %v124
    %v536 = vunpack.c.l.b16 %v125
    %v537 = vunpack.c.h.b16 %v125
    %v538 = vunpack.c.l.b16 %v126
    %v539 = vunpack.c.l.b16 %v127
    %v540 = vunpack.c.h.b16 %v127
    %v541 = vunpack.c.l.b16 %v128
    %v542 = vunpack.c.l.b16 %v129
    %v543 = vunpack.c.h.b16 %v129
    %v544 = vunpack.c.l.b16 %v130
    %v545 = vunpack.c.l.b16 %v131
    %v546 = vunpack.c.h.b16 %v131
    %v547 = vunpack.c.l.b16 %v132
    %v548 = vunpack.c.l.b16 %v133
    %v549 = vunpack.c.h.b16 %v133
    %v550 = vunpack.c.l.b16 %v134
    %v551 = vunpack.c.l.b16 %v135
    %v552 = vunpack.c.h.b16 %v135
    %v553 = vunpack.c.l.b16 %v136
    %v554 = vunpack.c.l.b16 %v137
    %v555 = vunpack.c.h.b16 %v137
    %v556 = vunpack.c.l.b16 %v138
    %v557 = vunpack.c.l.b16 %v139
    %v558 = vunpack.c.h.b16 %v139
    %v559 = vunpack.c.l.b16 %v140
    %v560 = vunpack.c.l.b16 %v141
    %v561 = vunpack.c.h.b16 %v141
    %v562 = vunpack.c.l.b16 %v142
    %v563 = vunpack.c.l.b16 %v143
    %v564 = vunpack.c.h.b16 %v143
    %v565 = vunpack.c.l.b16 %v144
    %v566 = vunpack.c.l.b16 %v145
    %v567 = vunpack.c.h.b16 %v145
    %v568 = vunpack.c.l.b16 %v146
    %v569 = vunpack.c.l.b16 %v147
    %v570 = vunpack.c.h.b16 %v147
    %v571 = vunpack.c.l.b16 %v148
    %v572 = vunpack.c.l.b16 %v149
    %v573 = vunpack.c.h.b16 %v149
    %v574 = vunpack.c.l.b16 %v150
    %v575 = vunpack.c.l.b16 %v151
    %v576 = vunpack.c.h.b16 %v151
    %v577 = vunpack.c.l.b16 %v152
    %v578 = vunpack.c.l.b16 %v153
    %v579 = vunpack.c.h.b16 %v153
    %v580 = vunpack.c.l.b16 %v154
    %v581 = vunpack.c.l.b16 %v155
    %v582 = vunpack.c.h.b16 %v155
    %v583 = vunpack.c.l.b16 %v156
    %v584 = vunpack.c.l.b16 %v157
    %v585 = vunpack.c.h.b16 %v157
    %v586 = vunpack.c.l.b16 %v158
    %v587 = vunpack.c.l.b16 %v159
    %v588 = vunpack.c.h.b16 %v159
    %v589 = vunpack.c.l.b16 %v160
    %v590 = vunpack.c.l.b16 %v161
    %v591 = vunpack.c.h.b16 %v161
    %v592 = vunpack.c.l.b16 %v162
    %v593 = vunpack.c.l.b16 %v163
    %v594 = vunpack.c.h.b16 %v163
    %v595 = vunpack.c.l.b16 %v164
    %v596 = vunpack.c.l.b16 %v165
    %v597 = vunpack.c.h.b16 %v165
    %v598 = vunpack.c.l.b16 %v166
    %v599 = vunpack.c.l.b16 %v167
    %v600 = vunpack.c.h.b16 %v167
    %v601 = vunpack.c.l.b16 %v168
    %v602 = vunpack.c.l.b16 %v169
    %v603 = vunpack.c.h.b16 %v169
    %v604 = vunpack.c.l.b16 %v170
    %v605 = vunpack.c.l.b16 %v171
    %v606 = vunpack.c.h.b16 %v171
    %v607 = vunpack.c.l.b16 %v172
    %v608 = vunpack.c.l.b16 %v173
    %v609 = vunpack.c.h.b16 %v173
    %v610 = vunpack.c.l.b16 %v174
    %v611 = vunpack.c.l.b16 %v175
    %v612 = vunpack.c.h.b16 %v175
    %v613 = vunpack.c.l.b16 %v176
    %v614 = vunpack.c.l.b16 %v177
    %v615 = vunpack.c.h.b16 %v177
    %v616 = vunpack.c.l.b16 %v178
    %v617 = vunpack.c.l.b16 %v179
    %v618 = vunpack.c.h.b16 %v179
    %v619 = vunpack.c.l.b16 %v180
    %v620 = vunpack.c.l.b16 %v181
    %v621 = vunpack.c.h.b16 %v181
    %v622 = vunpack.c.l.b16 %v182
    %v623 = vunpack.c.l.b16 %v183
    %v624 = vunpack.c.h.b16 %v183
    %v625 = vunpack.c.l.b16 %v184
    %v626 = vunpack.c.l.b16 %v185
    %v627 = vunpack.c.h.b16 %v185
    %v628 = vunpack.c.l.b16 %v186
    %v629 = vunpack.c.l.b16 %v187
    %v630 = vunpack.c.h.b16 %v187
    %v631 = vunpack.c.l.b16 %v188
    %v632 = vunpack.c.l.b16 %v189
    %v633 = vunpack.c.h.b16 %v189
    %v634 = vunpack.c.l.b16 %v190
    %v635 = vunpack.c.l.b16 %v191
    %v636 = vunpack.c.h.b16 %v191
    %v637 = vunpack.c.l.b16 %v192
    %v638 = vunpack.c.l.b16 %v193
    %v639 = vunpack.c.h.b16 %v193
    %v640 = vunpack.c.l.b16 %v194
    %v641 = vunpack.c.l.b16 %v195
    %v642 = vunpack.c.h.b16 %v195
    %v643 = vunpack.c.l.b16 %v196
    %v644 = vunpack.c.l.b16 %v197
    %v645 = vunpack.c.h.b16 %v197
    %v646 = vunpack.c.l.b16 %v198
    %v647 = vunpack.c.l.b16 %v199
    %v648 = vunpack.c.h.b16 %v199
    %v649 = vunpack.c.l.b16 %v200
    %v650 = vunpack.c.l.b16 %v201
    %v651 = vunpack.c.h.b16 %v201
    %v652 = vunpack.c.l.b16 %v202
    %v653 = vunpack.c.l.b16 %v203
    %v654 = vunpack.c.h.b16 %v203
    %v655 = vunpack.c.l.b16 %v204
    %v656 = vunpack.c.l.b16 %v205
    %v657 = vunpack.c.h.b16 %v205
    %v658 = vunpack.c.l.b16 %v206
    %v659 = vpack.c.b16 %v422, %v419
    %v660 = vpack.c.b16 %v423, %v420
    %v661 = vpack.c.b16 %v424, %v421
    %v662 = vpack.c.b16 %v428, %v425
    %v663 = vpack.c.b16 %v429, %v426
    %v664 = vpack.c.b16 %v430, %v427
    %v665 = vpack.c.b16 %v434, %v431
    %v666 = vpack.c.b16 %v435, %v432
    %v667 = vpack.c.b16 %v436, %v433
    %v668 = vpack.c.b16 %v440, %v437
    %v669 = vpack.c.b16 %v441, %v438
    %v670 = vpack.c.b16 %v442, %v439
    %v671 = vpack.c.b16 %v446, %v443
    %v672 = vpack.c.b16 %v447, %v444
    %v673 = vpack.c.b16 %v448, %v445
    %v674 = vpack.c.b16 %v452, %v449
    %v675 = vpack.c.b16 %v453, %v450
    %v676 = vpack.c.b16 %v454, %v451
    %v677 = vpack.c.b16 %v458, %v455
    %v678 = vpack.c.b16 %v459, %v456
    %v679 = vpack.c.b16 %v460, %v457
    %v680 = vpack.c.b16 %v464, %v461
    %v681 = vpack.c.b16 %v465, %v462
    %v682 = vpack.c.b16 %v466, %v463
    %v683 = vpack.c.b16 %v470, %v467
    %v684 = vpack.c.b16 %v471, %v468
    %v685 = vpack.c.b16 %v472, %v469
    %v686 = vpack.c.b16 %v476, %v473
    %v687 = vpack.c.b16 %v477, %v474
    %v688 = vpack.c.b16 %v478, %v475
    %v689 = vpack.c.b16 %v482, %v479
    %v690 = vpack.c.b16 %v483, %v480
    %v691 = vpack.c.b16 %v484, %v481
    %v692 = vpack.c.b16 %v488, %v485
    %v693 = vpack.c.b16 %v489, %v486
    %v694 = vpack.c.b16 %v490, %v487
    %v695 = vpack.c.b16 %v494, %v491
    %v696 = vpack.c.b16 %v495, %v492
    %v697 = vpack.c.b16 %v496, %v493
    %v698 = vpack.c.b16 %v500, %v497
    %v699 = vpack.c.b16 %v501, %v498
    %v700 = vpack.c.b16 %v502, %v499
    %v701 = vpack.c.b16 %v506, %v503
    %v702 = vpack.c.b16 %v507, %v504
    %v703 = vpack.c.b16 %v508, %v505
    %v704 = vpack.c.b16 %v512, %v509
    %v705 = vpack.c.b16 %v513, %v510
    %v706 = vpack.c.b16 %v514, %v511
    %v707 = vpack.c.b16 %v518, %v515
    %v708 = vpack.c.b16 %v519, %v516
    %v709 = vpack.c.b16 %v520, %v517
    %v710 = vpack.c.b16 %v524, %v521
    %v711 = vpack.c.b16 %v525, %v522
    %v712 = vpack.c.b16 %v526, %v523
    %v713 = vpack.c.b16 %v530, %v527
    %v714 = vpack.c.b16 %v531, %v528
    %v715 = vpack.c.b16 %v532, %v529
    %v716 = vpack.c.b16 %v536, %v533
    %v717 = vpack.c.b16 %v537, %v534
    %v718 = vpack.c.b16 %v538, %v535
    %v719 = vpack.c.b16 %v542, %v539
    %v720 = vpack.c.b16 %v543, %v540
    %v721 = vpack.c.b16 %v544, %v541
    %v722 = vpack.c.b16 %v548, %v545
    %v723 = vpack.c.b16 %v549, %v546
    %v724 = vpack.c.b16 %v550, %v547
    %v725 = vpack.c.b16 %v554, %v551
    %v726 = vpack.c.b16 %v555, %v552
    %v727 = vpack.c.b16 %v556, %v553
    %v728 = vpack.c.b16 %v560, %v557
    %v729 = vpack.c.b16 %v561, %v558
    %v730 = vpack.c.b16 %v562, %v559
    %v731 = vpack.c.b16 %v566, %v563
    %v732 = vpack.c.b16 %v567, %v564
    %v733 = vpack.c.b16 %v568, %v565
    %v734 = vpack.c.b16 %v572, %v569
    %v735 = vpack.c.b16 %v573, %v570
    %v736 = vpack.c.b16 %v574, %v571
    %v737 = vpack.c.b16 %v578, %v575
    %v738 = vpack.c.b16 %v579, %v576
    %v739 = vpack.c.b16 %v580, %v577
    %v740 = vpack.c.b16 %v584, %v581
    %v741 = vpack.c.b16 %v585, %v582
    %v742 = vpack.c.b16 %v586, %v583
    %v743 = vpack.c.b16 %v590, %v587
    %v744 = vpack.c.b16 %v591, %v588
    %v745 = vpack.c.b16 %v592, %v589
    %v746 = vpack.c.b16 %v596, %v593
    %v747 = vpack.c.b16 %v597, %v594
    %v748 = vpack.c.b16 %v598, %v595
    %v749 = vpack.c.b16 %v602, %v599
    %v750 = vpack.c.b16 %v603, %v600
    %v751 = vpack.c.b16 %v604, %v601
    %v752 = vpack.c.b16 %v608, %v605
    %v753 = vpack.c.b16 %v609, %v606
    %v754 = vpack.c.b16 %v610, %v607
    %v755 = vpack.c.b16 %v614, %v611
    %v756 = vpack.c.b16 %v615, %v612
    %v757 = vpack.c.b16 %v616, %v613
    %v758 = vpack.c.b16 %v620, %v617
    %v759 = vpack.c.b16 %v621, %v618
    %v760 = vpack.c.b16 %v622, %v619
    %v761 = vpack.c.b16 %v626, %v623
    %v762 = vpack.c.b16 %v627, %v624
    %v763 = vpack.c.b16 %v628, %v625
    %v764 = vpack.c.b16 %v632, %v629
    %v765 = vpack.c.b16 %v633, %v630
    %v766 = vpack.c.b16 %v634, %v631
    %v767 = vpack.c.b16 %v638, %v635
    %v768 = vpack.c.b16 %v639, %v636
    %v769 = vpack.c.b16 %v640, %v637
    %v770 = vpack.c.b16 %v644, %v641
    %v771 = vpack.c.b16 %v645, %v642
    %v772 = vpack.c.b16 %v646, %v643
    %v773 = vpack.c.b16 %v650, %v647
    %v774 = vpack.c.b16 %v651, %v648
    %v775 = vpack.c.b16 %v652, %v649
    %v776 = vpack.c.b16 %v656, %v653
    %v777 = vpack.c.b16 %v657, %v654
    %v778 = vpack.c.b16 %v658, %v655
    %899 = vmatprep.subr.bf16.mxu0 %v660
    %900 = vmatpush1.bf16.msra.mxu0 %v659
    %901 = vmatprep.subr.bf16.mxu0 %v663
    %902 = vmatpush1.bf16.msra.mxu0 %v662
    %903 = vmatprep.subr.bf16.mxu0 %v666
    %904 = vmatpush1.bf16.msra.mxu0 %v665
    %905 = vmatprep.subr.bf16.mxu0 %v669
    %906 = vmatpush1.bf16.msra.mxu0 %v668
    %907 = vmatprep.subr.bf16.mxu0 %v672
    %908 = vmatpush1.bf16.msra.mxu0 %v671
    %909 = vmatprep.subr.bf16.mxu0 %v675
    %910 = vmatpush1.bf16.msra.mxu0 %v674
    %911 = vmatprep.subr.bf16.mxu0 %v678
    %912 = vmatpush1.bf16.msra.mxu0 %v677
    %913 = vmatprep.subr.bf16.mxu0 %v681
    %914 = vmatpush1.bf16.msra.mxu0 %v680
    %915 = vmatprep.subr.bf16.mxu0 %v684
    %916 = vmatpush1.bf16.msra.mxu0 %v683
    %917 = vmatprep.subr.bf16.mxu0 %v687
    %918 = vmatpush1.bf16.msra.mxu0 %v686
    %919 = vmatprep.subr.bf16.mxu0 %v690
    %920 = vmatpush1.bf16.msra.mxu0 %v689
    %921 = vmatprep.subr.bf16.mxu0 %v693
    %922 = vmatpush1.bf16.msra.mxu0 %v692
    %923 = vmatprep.subr.bf16.mxu0 %v696
    %924 = vmatpush1.bf16.msra.mxu0 %v695
    %925 = vmatprep.subr.bf16.mxu0 %v699
    %926 = vmatpush1.bf16.msra.mxu0 %v698
    %927 = vmatprep.subr.bf16.mxu0 %v702
    %928 = vmatpush1.bf16.msra.mxu0 %v701
    %929 = vmatprep.subr.bf16.mxu0 %v705
    %930 = vmatpush1.bf16.msra.mxu0 %v704
    %931 = vmatprep.mubr.bf16.mxu0 %v240
    %932 = vmatmul.mubr.bf16.gmra.mrb[0].mxu0 %v239
    %v933 = vpop.f32.mrb[0].mxu0
    %v934 = vadd.f32 0.0, %v933
    %v935 = vpop.f32.mrb[0].mxu0
    %v936 = vadd.f32 0.0, %v935
    %v937 = vpop.f32.mrb[0].mxu0
    %v938 = vadd.f32 0.0, %v937
    %v939 = vpop.f32.mrb[0].mxu0
    %v940 = vadd.f32 0.0, %v939
    %941 = vmatprep.mubr.bf16.mxu0 %v245
    %942 = vmatmul.mubr.bf16.gmra.mrb[0].mxu0 %v244
    %v943 = vpop.f32.mrb[0].mxu0
    %v944 = vadd.f32 0.0, %v943
    %v945 = vpop.f32.mrb[0].mxu0
    %v946 = vadd.f32 0.0, %v945
    %v947 = vpop.f32.mrb[0].mxu0
    %v948 = vadd.f32 0.0, %v947
    %v949 = vpop.f32.mrb[0].mxu0
    %v950 = vadd.f32 0.0, %v949
    %951 = vdwg.mxu0
    %952 = vmatprep.subr.bf16.mxu0 %v708
    %953 = vmatpush1.bf16.msra.mxu0 %v707
    %954 = vmatprep.subr.bf16.mxu0 %v711
    %955 = vmatpush1.bf16.msra.mxu0 %v710
    %956 = vmatprep.subr.bf16.mxu0 %v714
    %957 = vmatpush1.bf16.msra.mxu0 %v713
    %958 = vmatprep.subr.bf16.mxu0 %v717
    %959 = vmatpush1.bf16.msra.mxu0 %v716
    %960 = vmatprep.subr.bf16.mxu0 %v720
    %961 = vmatpush1.bf16.msra.mxu0 %v719
    %962 = vmatprep.subr.bf16.mxu0 %v723
    %963 = vmatpush1.bf16.msra.mxu0 %v722
    %964 = vmatprep.subr.bf16.mxu0 %v726
    %965 = vmatpush1.bf16.msra.mxu0 %v725
    %966 = vmatprep.subr.bf16.mxu0 %v729
    %967 = vmatpush1.bf16.msra.mxu0 %v728
    %968 = vmatprep.subr.bf16.mxu0 %v732
    %969 = vmatpush1.bf16.msra.mxu0 %v731
    %970 = vmatprep.subr.bf16.mxu0 %v735
    %971 = vmatpush1.bf16.msra.mxu0 %v734
    %972 = vmatprep.subr.bf16.mxu0 %v738
    %973 = vmatpush1.bf16.msra.mxu0 %v737
    %974 = vmatprep.subr.bf16.mxu0 %v741
    %975 = vmatpush1.bf16.msra.mxu0 %v740
    %976 = vmatprep.subr.bf16.mxu0 %v744
    %977 = vmatpush1.bf16.msra.mxu0 %v743
    %978 = vmatprep.subr.bf16.mxu0 %v747
    %979 = vmatpush1.bf16.msra.mxu0 %v746
    %980 = vmatprep.subr.bf16.mxu0 %v750
    %981 = vmatpush1.bf16.msra.mxu0 %v749
    %982 = vmatprep.subr.bf16.mxu0 %v753
    %983 = vmatpush1.bf16.msra.mxu0 %v752
    %984 = vmatprep.mubr.bf16.mxu0 %v242
    %985 = vmatmul.mubr.bf16.gmra.mrb[0].mxu0 %v241
    %v986 = vpop.f32.mrb[0].mxu0
    %v987 = vadd.f32 %v934, %v986
    %v988 = vpop.f32.mrb[0].mxu0
    %v989 = vadd.f32 %v936, %v988
    %v990 = vpop.f32.mrb[0].mxu0
    %v991 = vadd.f32 %v938, %v990
    %v992 = vpop.f32.mrb[0].mxu0
    %v993 = vadd.f32 %v940, %v992
    %994 = vmatprep.mubr.bf16.mxu0 %v247
    %995 = vmatmul.mubr.bf16.gmra.mrb[0].mxu0 %v246
    %v996 = vpop.f32.mrb[0].mxu0
    %v997 = vadd.f32 %v944, %v996
    %v998 = vpop.f32.mrb[0].mxu0
    %v999 = vadd.f32 %v946, %v998
    %v1000 = vpop.f32.mrb[0].mxu0
    %v1001 = vadd.f32 %v948, %v1000
    %v1002 = vpop.f32.mrb[0].mxu0
    %v1003 = vadd.f32 %v950, %v1002
    %1004 = vdwg.mxu0
    %1005 = vmatprep.subr.bf16.mxu0 %v756
    %1006 = vmatpush1.bf16.msra.mxu0 %v755
    %1007 = vmatprep.subr.bf16.mxu0 %v759
    %1008 = vmatpush1.bf16.msra.mxu0 %v758
    %1009 = vmatprep.subr.bf16.mxu0 %v762
    %1010 = vmatpush1.bf16.msra.mxu0 %v761
    %1011 = vmatprep.subr.bf16.mxu0 %v765
    %1012 = vmatpush1.bf16.msra.mxu0 %v764
    %1013 = vmatprep.subr.bf16.mxu0 %v768
    %1014 = vmatpush1.bf16.msra.mxu0 %v767
    %1015 = vmatprep.subr.bf16.mxu0 %v771
    %1016 = vmatpush1.bf16.msra.mxu0 %v770
    %1017 = vmatprep.subr.bf16.mxu0 %v774
    %1018 = vmatpush1.bf16.msra.mxu0 %v773
    %1019 = vmatprep.subr.bf16.mxu0 %v777
    %1020 = vmatpush1.bf16.msra.mxu0 %v776
    %1021 = vmatprep.subr.bf16.mxu0 0
    %1022 = vmatpush1.bf16.msra.mxu0 0
    %1023 = vmatprep.subr.bf16.mxu0 0
    %1024 = vmatpush1.bf16.msra.mxu0 0
    %1025 = vmatprep.subr.bf16.mxu0 0
    %1026 = vmatpush1.bf16.msra.mxu0 0
    %1027 = vmatprep.subr.bf16.mxu0 0
    %1028 = vmatpush1.bf16.msra.mxu0 0
    %1029 = vmatprep.subr.bf16.mxu0 0
    %1030 = vmatpush1.bf16.msra.mxu0 0
    %1031 = vmatprep.subr.bf16.mxu0 0
    %1032 = vmatpush1.bf16.msra.mxu0 0
    %1033 = vmatprep.subr.bf16.mxu0 0
    %1034 = vmatpush1.bf16.msra.mxu0 0
    %1035 = vmatprep.subr.bf16.mxu0 0
    %1036 = vmatpush1.bf16.msra.mxu0 0
    %1037 = vmatprep.mubr.bf16.mxu0 0
    %1038 = vmatmul.mubr.bf16.gmra.mrb[0].mxu0 %v243
    %v1039 = vpop.f32.mrb[0].mxu0
    %v1040 = vadd.f32 %v987, %v1039
    %v1041 = vpop.f32.mrb[0].mxu0
    %v1042 = vadd.f32 %v989, %v1041
    %v1043 = vpop.f32.mrb[0].mxu0
    %v1044 = vadd.f32 %v991, %v1043
    %v1045 = vpop.f32.mrb[0].mxu0
    %v1046 = vadd.f32 %v993, %v1045
    %1047 = vmatprep.mubr.bf16.mxu0 0
    %1048 = vmatmul.mubr.bf16.gmra.mrb[0].mxu0 %v248
    %v1049 = vpop.f32.mrb[0].mxu0
    %v1050 = vadd.f32 %v997, %v1049
    %v1051 = vpop.f32.mrb[0].mxu0
    %v1052 = vadd.f32 %v999, %v1051
    %v1053 = vpop.f32.mrb[0].mxu0
    %v1054 = vadd.f32 %v1001, %v1053
    %v1055 = vpop.f32.mrb[0].mxu0
    %v1056 = vadd.f32 %v1003, %v1055
    %1057 = vdwg.mxu0
    %1058 = vmatprep.subr.bf16.mxu0 0
    %1059 = vmatpush1.bf16.msra.mxu0 %v661
    %1060 = vmatprep.subr.bf16.mxu0 0
    %1061 = vmatpush1.bf16.msra.mxu0 %v664
    %1062 = vmatprep.subr.bf16.mxu0 0
    %1063 = vmatpush1.bf16.msra.mxu0 %v667
    %1064 = vmatprep.subr.bf16.mxu0 0
    %1065 = vmatpush1.bf16.msra.mxu0 %v670
    %1066 = vmatprep.subr.bf16.mxu0 0
    %1067 = vmatpush1.bf16.msra.mxu0 %v673
    %1068 = vmatprep.subr.bf16.mxu0 0
    %1069 = vmatpush1.bf16.msra.mxu0 %v676
    %1070 = vmatprep.subr.bf16.mxu0 0
    %1071 = vmatpush1.bf16.msra.mxu0 %v679
    %1072 = vmatprep.subr.bf16.mxu0 0
    %1073 = vmatpush1.bf16.msra.mxu0 %v682
    %1074 = vmatprep.subr.bf16.mxu0 0
    %1075 = vmatpush1.bf16.msra.mxu0 %v685
    %1076 = vmatprep.subr.bf16.mxu0 0
    %1077 = vmatpush1.bf16.msra.mxu0 %v688
    %1078 = vmatprep.subr.bf16.mxu0 0
    %1079 = vmatpush1.bf16.msra.mxu0 %v691
    %1080 = vmatprep.subr.bf16.mxu0 0
    %1081 = vmatpush1.bf16.msra.mxu0 %v694
    %1082 = vmatprep.subr.bf16.mxu0 0
    %1083 = vmatpush1.bf16.msra.mxu0 %v697
    %1084 = vmatprep.subr.bf16.mxu0 0
    %1085 = vmatpush1.bf16.msra.mxu0 %v700
    %1086 = vmatprep.subr.bf16.mxu0 0
    %1087 = vmatpush1.bf16.msra.mxu0 %v703
    %1088 = vmatprep.subr.bf16.mxu0 0
    %1089 = vmatpush1.bf16.msra.mxu0 %v706
    %1090 = vmatprep.mubr.bf16.mxu0 %v240
    %1091 = vmatmul.mubr.bf16.gmra.mrb[0].mxu0 %v239
    %v1092 = vpop.f32.mrb[0].mxu0
    %v1093 = vadd.f32 0.0, %v1092
    %v1094 = vpop.f32.mrb[0].mxu0
    %v1095 = vpop.f32.mrb[0].mxu0
    %v1096 = vadd.f32 0.0, %v1095
    %v1097 = vpop.f32.mrb[0].mxu0
    %1098 = vmatprep.mubr.bf16.mxu0 %v245
    %1099 = vmatmul.mubr.bf16.gmra.mrb[0].mxu0 %v244
    %v1100 = vpop.f32.mrb[0].mxu0
    %v1101 = vadd.f32 0.0, %v1100
    %v1102 = vpop.f32.mrb[0].mxu0
    %v1103 = vpop.f32.mrb[0].mxu0
    %v1104 = vadd.f32 0.0, %v1103
    %v1105 = vpop.f32.mrb[0].mxu0
    %1106 = vdwg.mxu0
    %1107 = vmatprep.subr.bf16.mxu0 0
    %1108 = vmatpush1.bf16.msra.mxu0 %v709
    %1109 = vmatprep.subr.bf16.mxu0 0
    %1110 = vmatpush1.bf16.msra.mxu0 %v712
    %1111 = vmatprep.subr.bf16.mxu0 0
    %1112 = vmatpush1.bf16.msra.mxu0 %v715
    %1113 = vmatprep.subr.bf16.mxu0 0
    %1114 = vmatpush1.bf16.msra.mxu0 %v718
    %1115 = vmatprep.subr.bf16.mxu0 0
    %1116 = vmatpush1.bf16.msra.mxu0 %v721
    %1117 = vmatprep.subr.bf16.mxu0 0
    %1118 = vmatpush1.bf16.msra.mxu0 %v724
    %1119 = vmatprep.subr.bf16.mxu0 0
    %1120 = vmatpush1.bf16.msra.mxu0 %v727
    %1121 = vmatprep.subr.bf16.mxu0 0
    %1122 = vmatpush1.bf16.msra.mxu0 %v730
    %1123 = vmatprep.subr.bf16.mxu0 0
    %1124 = vmatpush1.bf16.msra.mxu0 %v733
    %1125 = vmatprep.subr.bf16.mxu0 0
    %1126 = vmatpush1.bf16.msra.mxu0 %v736
    %1127 = vmatprep.subr.bf16.mxu0 0
    %1128 = vmatpush1.bf16.msra.mxu0 %v739
    %1129 = vmatprep.subr.bf16.mxu0 0
    %1130 = vmatpush1.bf16.msra.mxu0 %v742
    %1131 = vmatprep.subr.bf16.mxu0 0
    %1132 = vmatpush1.bf16.msra.mxu0 %v745
    %1133 = vmatprep.subr.bf16.mxu0 0
    %1134 = vmatpush1.bf16.msra.mxu0 %v748
    %1135 = vmatprep.subr.bf16.mxu0 0
    %1136 = vmatpush1.bf16.msra.mxu0 %v751
    %1137 = vmatprep.subr.bf16.mxu0 0
    %1138 = vmatpush1.bf16.msra.mxu0 %v754
    %1139 = vmatprep.mubr.bf16.mxu0 %v242
    %1140 = vmatmul.mubr.bf16.gmra.mrb[0].mxu0 %v241
    %v1141 = vpop.f32.mrb[0].mxu0
    %v1142 = vadd.f32 %v1093, %v1141
    %v1143 = vpop.f32.mrb[0].mxu0
    %v1144 = vpop.f32.mrb[0].mxu0
    %v1145 = vadd.f32 %v1096, %v1144
    %v1146 = vpop.f32.mrb[0].mxu0
    %1147 = vmatprep.mubr.bf16.mxu0 %v247
    %1148 = vmatmul.mubr.bf16.gmra.mrb[0].mxu0 %v246
    %v1149 = vpop.f32.mrb[0].mxu0
    %v1150 = vadd.f32 %v1101, %v1149
    %v1151 = vpop.f32.mrb[0].mxu0
    %v1152 = vpop.f32.mrb[0].mxu0
    %v1153 = vadd.f32 %v1104, %v1152
    %v1154 = vpop.f32.mrb[0].mxu0
    %1155 = vdwg.mxu0
    %1156 = vmatprep.subr.bf16.mxu0 0
    %1157 = vmatpush1.bf16.msra.mxu0 %v757
    %1158 = vmatprep.subr.bf16.mxu0 0
    %1159 = vmatpush1.bf16.msra.mxu0 %v760
    %1160 = vmatprep.subr.bf16.mxu0 0
    %1161 = vmatpush1.bf16.msra.mxu0 %v763
    %1162 = vmatprep.subr.bf16.mxu0 0
    %1163 = vmatpush1.bf16.msra.mxu0 %v766
    %1164 = vmatprep.subr.bf16.mxu0 0
    %1165 = vmatpush1.bf16.msra.mxu0 %v769
    %1166 = vmatprep.subr.bf16.mxu0 0
    %1167 = vmatpush1.bf16.msra.mxu0 %v772
    %1168 = vmatprep.subr.bf16.mxu0 0
    %1169 = vmatpush1.bf16.msra.mxu0 %v775
    %1170 = vmatprep.subr.bf16.mxu0 0
    %1171 = vmatpush1.bf16.msra.mxu0 %v778
    %1172 = vmatprep.subr.bf16.mxu0 0
    %1173 = vmatpush1.bf16.msra.mxu0 0
    %1174 = vmatprep.subr.bf16.mxu0 0
    %1175 = vmatpush1.bf16.msra.mxu0 0
    %1176 = vmatprep.subr.bf16.mxu0 0
    %1177 = vmatpush1.bf16.msra.mxu0 0
    %1178 = vmatprep.subr.bf16.mxu0 0
    %1179 = vmatpush1.bf16.msra.mxu0 0
    %1180 = vmatprep.subr.bf16.mxu0 0
    %1181 = vmatpush1.bf16.msra.mxu0 0
    %1182 = vmatprep.subr.bf16.mxu0 0
    %1183 = vmatpush1.bf16.msra.mxu0 0
    %1184 = vmatprep.subr.bf16.mxu0 0
    %1185 = vmatpush1.bf16.msra.mxu0 0
    %1186 = vmatprep.subr.bf16.mxu0 0
    %1187 = vmatpush1.bf16.msra.mxu0 0
    %1188 = vmatprep.mubr.bf16.mxu0 0
    %1189 = vmatmul.mubr.bf16.gmra.mrb[0].mxu0 %v243
    %v1190 = vpop.f32.mrb[0].mxu0
    %v1191 = vadd.f32 %v1142, %v1190
    %v1192 = vpop.f32.mrb[0].mxu0
    %v1193 = vpop.f32.mrb[0].mxu0
    %v1194 = vadd.f32 %v1145, %v1193
    %v1195 = vpop.f32.mrb[0].mxu0
    %1196 = vmatprep.mubr.bf16.mxu0 0
    %1197 = vmatmul.mubr.bf16.gmra.mrb[0].mxu0 %v248
    %v1198 = vpop.f32.mrb[0].mxu0
    %v1199 = vadd.f32 %v1150, %v1198
    %v1200 = vpop.f32.mrb[0].mxu0
    %v1201 = vpop.f32.mrb[0].mxu0
    %v1202 = vadd.f32 %v1153, %v1201
    %v1203 = vpop.f32.mrb[0].mxu0
    %1204 = vdwg.mxu0
    %v1205 = vld [vmem:[%s2] sm:$0xff]
    %v1206 = vld [vmem:[%s2 + $0x8] sm:$0xff]
    %v1207 = vld [vmem:[%s2 + $0x10] sm:$0xff]
    %v1208 = vld [vmem:[%s2 + $0x18] sm:$0xff]
    %v1209 = vld [vmem:[%s2 + $0x20] sm:$0xff]
    %v1210 = vld [vmem:[%s2 + $0x28] sm:$0xff]
    %v1211 = vadd.f32 %v1040, %v1205
    %v1212 = vadd.f32 %v1042, %v1206
    %v1213 = vadd.f32 %v1191, %v1207
    %v1214 = vadd.f32 %v1044, %v1208
    %v1215 = vadd.f32 %v1046, %v1209
    %v1216 = vadd.f32 %v1194, %v1210
    %v1217 = vadd.f32 %v1050, %v1205
    %v1218 = vadd.f32 %v1052, %v1206
    %v1219 = vadd.f32 %v1199, %v1207
    %v1220 = vadd.f32 %v1054, %v1208
    %v1221 = vadd.f32 %v1056, %v1209
    %v1222 = vadd.f32 %v1202, %v1210
    %v1223 = vmax.f32 %v1211, %v1214
    %v1224 = vrot.slane %v1223, 4
    %v1225 = vmax.f32 %v1223, %v1224
    %v1226 = vrot.slane %v1225, 2
    %v1227 = vmax.f32 %v1225, %v1226
    %v1228 = vrot.slane %v1227, 1
    %v1229 = vmax.f32 %v1227, %v1228
    %v1230 = vmax.f32 %v1212, %v1215
    %v1231 = vrot.slane %v1230, 4
    %v1232 = vmax.f32 %v1230, %v1231
    %v1233 = vrot.slane %v1232, 2
    %v1234 = vmax.f32 %v1232, %v1233
    %v1235 = vrot.slane %v1234, 1
    %v1236 = vmax.f32 %v1234, %v1235
    %v1237 = vmax.f32 %v1213, %v1216
    %v1238 = vrot.slane %v1237, 4
    %v1239 = vmax.f32 %v1237, %v1238
    %v1240 = vrot.slane %v1239, 2
    %v1241 = vmax.f32 %v1239, %v1240
    %v1242 = vrot.slane %v1241, 1
    %v1243 = vmax.f32 %v1241, %v1242
    %v1244 = vmax.f32 %v1217, %v1220
    %v1245 = vrot.slane %v1244, 4
    %v1246 = vmax.f32 %v1244, %v1245
    %v1247 = vrot.slane %v1246, 2
    %v1248 = vmax.f32 %v1246, %v1247
    %v1249 = vrot.slane %v1248, 1
    %v1250 = vmax.f32 %v1248, %v1249
    %v1251 = vmax.f32 %v1218, %v1221
    %v1252 = vrot.slane %v1251, 4
    %v1253 = vmax.f32 %v1251, %v1252
    %v1254 = vrot.slane %v1253, 2
    %v1255 = vmax.f32 %v1253, %v1254
    %v1256 = vrot.slane %v1255, 1
    %v1257 = vmax.f32 %v1255, %v1256
    %v1258 = vmax.f32 %v1219, %v1222
    %v1259 = vrot.slane %v1258, 4
    %v1260 = vmax.f32 %v1258, %v1259
    %v1261 = vrot.slane %v1260, 2
    %v1262 = vmax.f32 %v1260, %v1261
    %v1263 = vrot.slane %v1262, 1
    %v1264 = vmax.f32 %v1262, %v1263
    %v1265 = vmax.f32 %v1229, 0.0
    %v1266 = vmax.f32 %v1236, 0.0
    %v1267 = vmax.f32 %v1243, 0.0
    %v1268 = vmax.f32 %v1250, 0.0
    %v1269 = vmax.f32 %v1257, 0.0
    %v1270 = vmax.f32 %v1264, 0.0
    %vm1277 = vcmask 1041409
    %v1278 = vsel %vm1277, %v1268, %v1265
    %v1279 = vsel %vm1277, %v1269, %v1266
    %v1280 = vsel %vm1277, %v1270, %v1267
    %vm1284 = vcmask 1041408
    %v1285 = vsel %vm1284, %v1278, 0.0
    %v1286 = vsel %vm1284, %v1279, 0.0
    %v1287 = vsel %vm1284, %v1280, 0.0
    %v1288 = vpack.c.bf16 %v1285, %v1285
    %v1289 = vpack.c.bf16 %v1286, %v1286
    %v1290 = vpack.c.bf16 %v1287, %v1287
    %v1291 = vld [vmem:[%s3] sm:$0xf]
    %v1292 = vld [vmem:[%s3 + $0x4] sm:$0xf]
    %v1293 = vld [vmem:[%s3 + $0x8] sm:$0xf]
    %v1294 = vld [vmem:[%s3 + $0xc] sm:$0xf]
    %v1295 = vld [vmem:[%s3 + $0x10] sm:$0xf]
    %v1296 = vld [vmem:[%s3 + $0x14] sm:$0xf]
    %v1297 = vld [vmem:[%s3 + $0x18] sm:$0xf]
    %v1298 = vld [vmem:[%s3 + $0x1c] sm:$0xf]
    %v1299 = vld [vmem:[%s3 + $0x20] sm:$0xf]
    %v1300 = vld [vmem:[%s3 + $0x24] sm:$0xf]
    %v1301 = vld [vmem:[%s3 + $0x28] sm:$0xf]
    %v1302 = vld [vmem:[%s3 + $0x2c] sm:$0xf]
    %v1303 = vld [vmem:[%s3 + $0x30] sm:$0xf]
    %v1304 = vld [vmem:[%s3 + $0x34] sm:$0xf]
    %v1305 = vld [vmem:[%s3 + $0x38] sm:$0xf]
    %v1306 = vld [vmem:[%s3 + $0x3c] sm:$0xf]
    %v1307 = vld [vmem:[%s3 + $0x40] sm:$0xf]
    %v1308 = vld [vmem:[%s3 + $0x44] sm:$0xf]
    %v1309 = vld [vmem:[%s3 + $0x48] sm:$0xf]
    %v1310 = vld [vmem:[%s3 + $0x4c] sm:$0xf]
    %v1311 = vld [vmem:[%s3 + $0x50] sm:$0xf]
    %v1312 = vld [vmem:[%s3 + $0x54] sm:$0xf]
    %v1313 = vld [vmem:[%s3 + $0x58] sm:$0xf]
    %v1314 = vld [vmem:[%s3 + $0x5c] sm:$0xf]
    %v1315 = vld [vmem:[%s3 + $0x60] sm:$0xf]
    %v1316 = vld [vmem:[%s3 + $0x64] sm:$0xf]
    %v1317 = vld [vmem:[%s3 + $0x68] sm:$0xf]
    %v1318 = vld [vmem:[%s3 + $0x6c] sm:$0xf]
    %v1319 = vld [vmem:[%s3 + $0x70] sm:$0xf]
    %v1320 = vld [vmem:[%s3 + $0x74] sm:$0xf]
    %v1321 = vld [vmem:[%s3 + $0x78] sm:$0xf]
    %v1322 = vld [vmem:[%s3 + $0x7c] sm:$0xf]
    %v1323 = vld [vmem:[%s3 + $0x80] sm:$0xf]
    %v1324 = vld [vmem:[%s3 + $0x84] sm:$0xf]
    %v1325 = vld [vmem:[%s3 + $0x88] sm:$0xf]
    %v1326 = vld [vmem:[%s3 + $0x8c] sm:$0xf]
    %v1327 = vld [vmem:[%s3 + $0x90] sm:$0xf]
    %v1328 = vld [vmem:[%s3 + $0x94] sm:$0xf]
    %v1329 = vld [vmem:[%s3 + $0x98] sm:$0xf]
    %v1330 = vld [vmem:[%s3 + $0x9c] sm:$0xf]
    %v1331 = vld [vmem:[%s3 + $0xa0] sm:$0xf]
    %v1332 = vld [vmem:[%s3 + $0xa4] sm:$0xf]
    %v1333 = vld [vmem:[%s3 + $0xa8] sm:$0xf]
    %v1334 = vld [vmem:[%s3 + $0xac] sm:$0xf]
    %v1335 = vld [vmem:[%s3 + $0xb0] sm:$0xf]
    %v1336 = vld [vmem:[%s3 + $0xb4] sm:$0xf]
    %v1337 = vld [vmem:[%s3 + $0xb8] sm:$0xf]
    %v1338 = vld [vmem:[%s3 + $0xbc] sm:$0xf]
    %v1339 = vld [vmem:[%s4] sm:$0x1]
    %v1341 = vlaneseq
    %v1342 = vshrl.u32 %v1341, 7
    %v1343 = vsub.s32 0, %v1342
    %v1344 = vrot.slane %v1339, %v1343
    %v1394 = vunpack.c.l.b16 %v1291
    %v1395 = vunpack.c.l.b16 %v1292
    %v1396 = vunpack.c.l.b16 %v1293
    %v1397 = vunpack.c.l.b16 %v1294
    %v1398 = vunpack.c.l.b16 %v1295
    %v1399 = vunpack.c.l.b16 %v1296
    %v1400 = vunpack.c.l.b16 %v1297
    %v1401 = vunpack.c.l.b16 %v1298
    %v1402 = vunpack.c.l.b16 %v1299
    %v1403 = vunpack.c.l.b16 %v1300
    %v1404 = vunpack.c.l.b16 %v1301
    %v1405 = vunpack.c.l.b16 %v1302
    %v1406 = vunpack.c.l.b16 %v1303
    %v1407 = vunpack.c.l.b16 %v1304
    %v1408 = vunpack.c.l.b16 %v1305
    %v1409 = vunpack.c.l.b16 %v1306
    %v1410 = vunpack.c.l.b16 %v1307
    %v1411 = vunpack.c.l.b16 %v1308
    %v1412 = vunpack.c.l.b16 %v1309
    %v1413 = vunpack.c.l.b16 %v1310
    %v1414 = vunpack.c.l.b16 %v1311
    %v1415 = vunpack.c.l.b16 %v1312
    %v1416 = vunpack.c.l.b16 %v1313
    %v1417 = vunpack.c.l.b16 %v1314
    %v1418 = vunpack.c.l.b16 %v1315
    %v1419 = vunpack.c.l.b16 %v1316
    %v1420 = vunpack.c.l.b16 %v1317
    %v1421 = vunpack.c.l.b16 %v1318
    %v1422 = vunpack.c.l.b16 %v1319
    %v1423 = vunpack.c.l.b16 %v1320
    %v1424 = vunpack.c.l.b16 %v1321
    %v1425 = vunpack.c.l.b16 %v1322
    %v1426 = vunpack.c.l.b16 %v1323
    %v1427 = vunpack.c.l.b16 %v1324
    %v1428 = vunpack.c.l.b16 %v1325
    %v1429 = vunpack.c.l.b16 %v1326
    %v1430 = vunpack.c.l.b16 %v1327
    %v1431 = vunpack.c.l.b16 %v1328
    %v1432 = vunpack.c.l.b16 %v1329
    %v1433 = vunpack.c.l.b16 %v1330
    %v1434 = vunpack.c.l.b16 %v1331
    %v1435 = vunpack.c.l.b16 %v1332
    %v1436 = vunpack.c.l.b16 %v1333
    %v1437 = vunpack.c.l.b16 %v1334
    %v1438 = vunpack.c.l.b16 %v1335
    %v1439 = vunpack.c.l.b16 %v1336
    %v1440 = vunpack.c.l.b16 %v1337
    %v1441 = vunpack.c.l.b16 %v1338
    %v1442 = vpack.c.b16 %v1395, %v1394
    %v1443 = vpack.c.b16 %v1397, %v1396
    %v1444 = vpack.c.b16 %v1399, %v1398
    %v1445 = vpack.c.b16 %v1401, %v1400
    %v1446 = vpack.c.b16 %v1403, %v1402
    %v1447 = vpack.c.b16 %v1405, %v1404
    %v1448 = vpack.c.b16 %v1407, %v1406
    %v1449 = vpack.c.b16 %v1409, %v1408
    %v1450 = vpack.c.b16 %v1411, %v1410
    %v1451 = vpack.c.b16 %v1413, %v1412
    %v1452 = vpack.c.b16 %v1415, %v1414
    %v1453 = vpack.c.b16 %v1417, %v1416
    %v1454 = vpack.c.b16 %v1419, %v1418
    %v1455 = vpack.c.b16 %v1421, %v1420
    %v1456 = vpack.c.b16 %v1423, %v1422
    %v1457 = vpack.c.b16 %v1425, %v1424
    %v1458 = vpack.c.b16 %v1427, %v1426
    %v1459 = vpack.c.b16 %v1429, %v1428
    %v1460 = vpack.c.b16 %v1431, %v1430
    %v1461 = vpack.c.b16 %v1433, %v1432
    %v1462 = vpack.c.b16 %v1435, %v1434
    %v1463 = vpack.c.b16 %v1437, %v1436
    %v1464 = vpack.c.b16 %v1439, %v1438
    %v1465 = vpack.c.b16 %v1441, %v1440
    %1490 = vmatprep.subr.bf16.mxu0 0
    %1491 = vmatpush1.bf16.msra.mxu0 %v1442
    %1492 = vmatprep.subr.bf16.mxu0 0
    %1493 = vmatpush1.bf16.msra.mxu0 %v1443
    %1494 = vmatprep.subr.bf16.mxu0 0
    %1495 = vmatpush1.bf16.msra.mxu0 %v1444
    %1496 = vmatprep.subr.bf16.mxu0 0
    %1497 = vmatpush1.bf16.msra.mxu0 %v1445
    %1498 = vmatprep.subr.bf16.mxu0 0
    %1499 = vmatpush1.bf16.msra.mxu0 %v1446
    %1500 = vmatprep.subr.bf16.mxu0 0
    %1501 = vmatpush1.bf16.msra.mxu0 %v1447
    %1502 = vmatprep.subr.bf16.mxu0 0
    %1503 = vmatpush1.bf16.msra.mxu0 %v1448
    %1504 = vmatprep.subr.bf16.mxu0 0
    %1505 = vmatpush1.bf16.msra.mxu0 %v1449
    %1506 = vmatprep.subr.bf16.mxu0 0
    %1507 = vmatpush1.bf16.msra.mxu0 %v1450
    %1508 = vmatprep.subr.bf16.mxu0 0
    %1509 = vmatpush1.bf16.msra.mxu0 %v1451
    %1510 = vmatprep.subr.bf16.mxu0 0
    %1511 = vmatpush1.bf16.msra.mxu0 %v1452
    %1512 = vmatprep.subr.bf16.mxu0 0
    %1513 = vmatpush1.bf16.msra.mxu0 %v1453
    %1514 = vmatprep.subr.bf16.mxu0 0
    %1515 = vmatpush1.bf16.msra.mxu0 %v1454
    %1516 = vmatprep.subr.bf16.mxu0 0
    %1517 = vmatpush1.bf16.msra.mxu0 %v1455
    %1518 = vmatprep.subr.bf16.mxu0 0
    %1519 = vmatpush1.bf16.msra.mxu0 %v1456
    %1520 = vmatprep.subr.bf16.mxu0 0
    %1521 = vmatpush1.bf16.msra.mxu0 %v1457
    %1522 = vmatprep.mubr.bf16.mxu0 %v1289
    %1523 = vmatmul.mubr.bf16.gmra.mrb[0].mxu0 %v1288
    %v1524 = vpop.f32.mrb[0].mxu0
    %v1525 = vadd.f32 %v1344, %v1524
    %v1526 = vpop.f32.mrb[0].mxu0
    %v1527 = vpop.f32.mrb[0].mxu0
    %v1528 = vpop.f32.mrb[0].mxu0
    %1529 = vdwg.mxu0
    %1530 = vmatprep.subr.bf16.mxu0 0
    %1531 = vmatpush1.bf16.msra.mxu0 %v1458
    %1532 = vmatprep.subr.bf16.mxu0 0
    %1533 = vmatpush1.bf16.msra.mxu0 %v1459
    %1534 = vmatprep.subr.bf16.mxu0 0
    %1535 = vmatpush1.bf16.msra.mxu0 %v1460
    %1536 = vmatprep.subr.bf16.mxu0 0
    %1537 = vmatpush1.bf16.msra.mxu0 %v1461
    %1538 = vmatprep.subr.bf16.mxu0 0
    %1539 = vmatpush1.bf16.msra.mxu0 %v1462
    %1540 = vmatprep.subr.bf16.mxu0 0
    %1541 = vmatpush1.bf16.msra.mxu0 %v1463
    %1542 = vmatprep.subr.bf16.mxu0 0
    %1543 = vmatpush1.bf16.msra.mxu0 %v1464
    %1544 = vmatprep.subr.bf16.mxu0 0
    %1545 = vmatpush1.bf16.msra.mxu0 %v1465
    %1546 = vmatprep.subr.bf16.mxu0 0
    %1547 = vmatpush1.bf16.msra.mxu0 0
    %1548 = vmatprep.subr.bf16.mxu0 0
    %1549 = vmatpush1.bf16.msra.mxu0 0
    %1550 = vmatprep.subr.bf16.mxu0 0
    %1551 = vmatpush1.bf16.msra.mxu0 0
    %1552 = vmatprep.subr.bf16.mxu0 0
    %1553 = vmatpush1.bf16.msra.mxu0 0
    %1554 = vmatprep.subr.bf16.mxu0 0
    %1555 = vmatpush1.bf16.msra.mxu0 0
    %1556 = vmatprep.subr.bf16.mxu0 0
    %1557 = vmatpush1.bf16.msra.mxu0 0
    %1558 = vmatprep.subr.bf16.mxu0 0
    %1559 = vmatpush1.bf16.msra.mxu0 0
    %1560 = vmatprep.subr.bf16.mxu0 0
    %1561 = vmatpush1.bf16.msra.mxu0 0
    %1562 = vmatprep.mubr.bf16.mxu0 0
    %1563 = vmatmul.mubr.bf16.gmra.mrb[0].mxu0 %v1290
    %v1564 = vpop.f32.mrb[0].mxu0
    %v1565 = vadd.f32 %v1525, %v1564
    %v1566 = vpop.f32.mrb[0].mxu0
    %v1567 = vpop.f32.mrb[0].mxu0
    %v1568 = vpop.f32.mrb[0].mxu0
    %1569 = vdwg.mxu0
    %1570 = vst [vmem:[%s5] sm:$0xff] %v1565
    // Predicated region
    $region26: #{textcnn_forward.1} parent=1 // pred_check
      _
    $region27: #{textcnn_forward.1} parent=1 // pred_check_branch
      %1572 = sbr.rel (0) target = $region29
    $region28: #{textcnn_forward.1} parent=1 // pred_region
      _
    $region29: #{textcnn_forward.1} parent=1 // pred_fallthru
      _
    // Predicated region
    $region30: #{textcnn_forward.1} parent=1 // pred_check
      _
    $region31: #{textcnn_forward.1} parent=1 // pred_check_branch
      %1574 = sbr.rel (0) target = $region33
    $region32: #{textcnn_forward.1} parent=1 // pred_region
      _
    $region33: #{textcnn_forward.1} parent=1 // pred_fallthru
      _
    %1575 = vsyncpa [#allocation3], 1

</llo_original>
